<compile_context>
chip_gen: v6e
topology: v6e:2x2x1
jax: 0.10.0
libtpu: 0.0.40
codegen_flags: <defaults>
</compile_context>

<pallas_src>
import jax
import jax.numpy as jnp
from jax.experimental import pallas as pl
from jax.experimental.pallas import tpu as pltpu

LANES = 128
MAX_BLOCK_BYTES = 4 * 1024 * 1024      # ~4 MiB per input block
VMEM_LIMIT_BYTES = 32 * 1024 * 1024    # in+out double-buffered 4 MiB blocks ≈ 16 MiB


def _expr_memb_kernel(params_ref, x_ref, o_ref):
    # params (SMEM): [scale, bias] with 0.5*dist = x*scale + bias, precomputed
    # once wrapper-side (scale = 0.5*sign/a, bias = 0.5*shift/a).
    scale = params_ref[0]
    bias = params_ref[1]
    xf = x_ref[...].astype(jnp.float32)
    # 1/(1+exp(dist)) == 0.5 - 0.5*tanh(dist/2): one EUP push per vreg, no divide.
    result = 0.5 - 0.5 * jnp.tanh(xf * scale + bias)
    o_ref[...] = result.astype(o_ref.dtype)


def _sublane_multiple(dtype):
    itemsize = jnp.dtype(dtype).itemsize
    return {4: 8, 2: 16, 1: 32}.get(itemsize, 8)


def _scale_bias(a, c1, c2, c3, right_side):
    a32 = jnp.float32(a)
    c1_, c2_, c3_ = jnp.float32(c1), jnp.float32(c2), jnp.float32(c3)
    inv_a = jnp.float32(1.0) / a32
    if right_side:
        sign = jnp.float32(-1.0)
        shift = c1_ + c2_ + c3_
    else:
        sign = jnp.float32(1.0)
        shift = -c1_ + c2_ + c3_
    # 0.5 folded in for the tanh identity.
    scale = jnp.float32(0.5) * sign * inv_a
    bias = jnp.float32(0.5) * shift * inv_a
    return scale, bias


def _pointwise(v, scale, bias, out_dtype):
    # Plain-jnp path for tiny tails / degenerate sizes (same math as the kernel).
    r = 0.5 - 0.5 * jnp.tanh(v.astype(jnp.float32) * scale + bias)
    return r.astype(out_dtype)


def joint_expr_memb(x, a, c1, c2, c3, right_side=False, donate_x=False):
    """Inverted-exponential (sigmoid-style) membership function, elementwise in x."""
    orig_shape = x.shape
    orig_dtype = x.dtype
    scale, bias = _scale_bias(a, c1, c2, c3, right_side)
    params = jnp.stack([scale, bias]).astype(jnp.float32)

    flat = x.reshape(-1)
    n = flat.shape[0]
    n_main = (n // LANES) * LANES

    if n_main == 0:
        # Fewer than 128 elements: kernel launch not worth it.
        return _pointwise(flat, scale, bias, orig_dtype).reshape(orig_shape)

    # Lane-dense (rows, 128) view of the 128-aligned prefix (free reshape when
    # n is already a multiple of 128, which is the common case).
    main = flat if n_main == n else flat[:n_main]
    rows = n_main // LANES
    x2 = main.reshape(rows, LANES)

    # Block sizing: ~4 MiB blocks, rounded to the dtype's sublane multiple,
    # clamped so the grid has >= 2 steps (v7x megacore) when rows allow it.
    sub = _sublane_multiple(orig_dtype)
    itemsize = jnp.dtype(orig_dtype).itemsize
    max_rows = max(sub, (MAX_BLOCK_BYTES // (LANES * itemsize)) // sub * sub)
    if rows <= sub:
        tile_rows = rows                      # single full-extent block
    else:
        half = pl.cdiv(rows, 2)
        tile_rows = min(max_rows, max(sub, (half // sub) * sub))
    grid = (pl.cdiv(rows, tile_rows),)

    kwargs = {}
    if donate_x and n_main == n:
        # Output reuses x's HBM allocation when the caller donates x.
        kwargs["input_output_aliases"] = {1: 0}

    out2 = pl.pallas_call(
        _expr_memb_kernel,
        out_shape=jax.ShapeDtypeStruct((rows, LANES), orig_dtype),
        grid=grid,
        in_specs=[
            pl.BlockSpec(memory_space=pltpu.SMEM),               # scalar params
            pl.BlockSpec((tile_rows, LANES), lambda i: (i, 0)),  # x tile
        ],
        out_specs=pl.BlockSpec((tile_rows, LANES), lambda i: (i, 0)),
        compiler_params=pltpu.CompilerParams(
            dimension_semantics=("parallel",),
            vmem_limit_bytes=VMEM_LIMIT_BYTES,
        ),
        **kwargs,
    )(params, x2)

    out_flat = out2.reshape(-1)
    if n_main < n:
        # <128-element tail handled with plain jnp (no whole-array pad/slice).
        tail_out = _pointwise(flat[n_main:], scale, bias, orig_dtype)
        out_flat = jnp.concatenate([out_flat, tail_out])
    return out_flat.reshape(orig_shape)


def _reference(x, a, c1, c2, c3, right_side=False):
    # Pure-JAX mirror of the PyTorch forward (exp + reciprocal form).
    if right_side:
        c = -x + c1 + c2 + c3
    else:
        c = x - c1 + c2 + c3
    dist = c / a
    return 1.0 / (1.0 + jnp.exp(dist))


# TODO(synk): a_log_hook (NaN-scrubbing gradient hook on `a`) is backward-pass
# only and has no forward-pass equivalent here.

if __name__ == "__main__":
    key = jax.random.PRNGKey(0)
    B, C, H, W = 2, 4, 16, 16
    x = jax.random.normal(key, (B, C, H, W), dtype=jnp.float32)

    # Deterministic scalar parameters (as registered in __init__).
    a_param = 0.8
    c1_param = 0.5
    c2_param = 0.25
    c3_param = -0.1

    ok = True

    # f32, both sides.
    for right_side in (False, True):
        y = joint_expr_memb(x, a_param, c1_param, c2_param, c3_param,
                            right_side=right_side)
        y = jax.block_until_ready(y)
        y_ref = _reference(x, a_param, c1_param, c2_param, c3_param,
                           right_side=right_side)
        ok = ok and (y.shape == (B, C, H, W)) and (y.dtype == x.dtype)
        ok = ok and bool(jnp.allclose(y, y_ref, atol=1e-5, rtol=1e-5))

    # bf16 input: dtype-safe store + (16,128) sublane tiling.
    xb = x.astype(jnp.bfloat16)
    yb = jax.block_until_ready(
        joint_expr_memb(xb, a_param, c1_param, c2_param, c3_param))
    yb_ref = _reference(xb.astype(jnp.float32), a_param, c1_param, c2_param,
                        c3_param).astype(jnp.bfloat16)
    ok = ok and (yb.dtype == jnp.bfloat16)
    ok = ok and bool(jnp.allclose(yb.astype(jnp.float32),
                                  yb_ref.astype(jnp.float32),
                                  atol=1.5e-2, rtol=0.0))

    # Element count not a multiple of 128: aligned-prefix kernel + jnp tail.
    xr = jax.random.normal(jax.random.PRNGKey(1), (3, 7, 13), dtype=jnp.float32)
    yr = jax.block_until_ready(
        joint_expr_memb(xr, a_param, c1_param, c2_param, c3_param,
                        right_side=True))
    yr_ref = _reference(xr, a_param, c1_param, c2_param, c3_param,
                        right_side=True)
    ok = ok and (yr.shape == xr.shape)
    ok = ok and bool(jnp.allclose(yr, yr_ref, atol=1e-5, rtol=1e-5))

    assert ok
    print("KERNEL_OK")
</pallas_src>

<mosaic_0001>
module attributes {stable_mosaic.version = 11 : i64} {
  func.func @_expr_memb_kernel(%arg0: i32, %arg1: memref<2xf32, #tpu.memory_space<smem>>, %arg2: memref<8x128xf32, #tpu.memory_space<vmem>>, %arg3: memref<8x128xf32, #tpu.memory_space<vmem>>) attributes {dimension_semantics = [#tpu.dimension_semantics<parallel>], iteration_bounds = array<i64: 2>, scalar_prefetch = 0 : i64, scratch_operands = 0 : i64, tpu.core_type = #tpu.core_type<tc>, window_params = [{transform_indices = @transform_0, window_bounds = array<i64: 2>}, {transform_indices = @transform_1, window_bounds = array<i64: 8, 128>}, {transform_indices = @transform_2, window_bounds = array<i64: 8, 128>}]} {
    %c0 = arith.constant 0 : index
    %0 = memref.load %arg1[%c0] : memref<2xf32, #tpu.memory_space<smem>>
    %c1 = arith.constant 1 : index
    %1 = memref.load %arg1[%c1] : memref<2xf32, #tpu.memory_space<smem>>
    %c0_0 = arith.constant 0 : index
    %c0_1 = arith.constant 0 : index
    %2 = vector.load %arg2[%c0_0, %c0_1] : memref<8x128xf32, #tpu.memory_space<vmem>>, vector<8x128xf32>
    %3 = vector.broadcast %0 : f32 to vector<8x128xf32>
    %4 = arith.mulf %2, %3 : vector<8x128xf32>
    %5 = vector.broadcast %1 : f32 to vector<8x128xf32>
    %6 = arith.addf %4, %5 : vector<8x128xf32>
    %7 = math.tanh %6 : vector<8x128xf32>
    %cst = arith.constant 5.000000e-01 : f32
    %8 = vector.broadcast %cst : f32 to vector<8x128xf32>
    %9 = arith.mulf %8, %7 : vector<8x128xf32>
    %cst_2 = arith.constant 5.000000e-01 : f32
    %10 = vector.broadcast %cst_2 : f32 to vector<8x128xf32>
    %11 = arith.subf %10, %9 : vector<8x128xf32>
    %c0_3 = arith.constant 0 : index
    %c0_4 = arith.constant 0 : index
    %12 = vector.load %arg3[%c0_3, %c0_4] : memref<8x128xf32, #tpu.memory_space<vmem>>, vector<8x128xf32>
    tpu.vector_store %arg3[%c0_3, %c0_4], %11 {strides = array<i32>} : memref<8x128xf32, #tpu.memory_space<vmem>>, vector<8x128xf32>,
    return
  }
  func.func @transform_0(%arg0: i32) -> i32 {
    %c0_i32 = arith.constant 0 : i32
    %c0_i32_0 = arith.constant 0 : i32
    return %c0_i32 : i32
  }
  func.func @transform_1(%arg0: i32) -> (i32, i32) {
    %c0_i32 = arith.constant 0 : i32
    %c0_i32_0 = arith.constant 0 : i32
    return %arg0, %c0_i32 : i32, i32
  }
  func.func @transform_2(%arg0: i32) -> (i32, i32) {
    %c0_i32 = arith.constant 0 : i32
    %c0_i32_0 = arith.constant 0 : i32
    return %arg0, %c0_i32 : i32, i32
  }
}

</mosaic_0001>

<llo_original>
// kernel: tpu_custom_call.1
$region0: #{tpu_custom_call.1}
  #allocation0 [shape = 'u32[]', space=smem, size = 0x4, offset = 0x4, fixed_abs, tag = 'smem constant byte address 0x4 - core index']
  #allocation1 [shape = 'u32[144,128]{1,0:T(1,128)}', space=vmem, size = 0x12000, scoped, tag = 'internal scratch']
  %s0 = inlined_call_operand.hbm [shape: f32[2], index: 0, kind: input, shape index: {}]
  %s1 = inlined_call_operand.hbm [shape: f32[16,128], index: 1, kind: input, shape index: {}]
  %s2 = inlined_call_operand.hbm [shape: f32[16,128], index: 2, kind: output, shape index: {}]
  %s3 = sld [smem:[#allocation0]]
  $region49: #{tpu_custom_call.1} parent=0
    _
  %s5 = ssub.s32 1, %s3
  %s6 = scalar_select 0, %s5, %s3
  $region1: #{tpu_custom_call.1} parent=0
    #allocation2 [shape = 'u8[512]{0}', space=smem, size = 0x200, scoped, tag = 'input window, operand 0, single buffered']
    #allocation3 [shape = 's32[2]{0}', space=sflag, size = 0x8, scoped, tag = 'scoped memory for tpu_custom_call.1']
    #allocation4 [shape = 's32[2]{0}', space=sflag, size = 0x8, scoped, tag = 'scoped memory for tpu_custom_call.1']
    #allocation5 [shape = 's32[2]{0}', space=sflag, size = 0x8, scoped, tag = 'scoped memory for tpu_custom_call.1']
    #allocation6 [shape = 'u8[8192]{0}', space=vmem, size = 0x2000, scoped, tag = 'input window, operand 1']
    #allocation7 [shape = 'u8[8192]{0}', space=vmem, size = 0x2000, scoped, tag = 'output window, operand 0']
    %7 = vsyncpa [#allocation5], 0
    %8 = vsyncpa [#allocation3], 0
    %s9 = scalar_lea.sflag [#allocation3], 1
    %10 = vsyncpa %s9, 0
    %11 = vsyncpa [#allocation4], 0
    %s12 = scalar_lea.sflag [#allocation4], 1
    %13 = vsyncpa %s12, 0
    loop: start=0, step=1, limit=4
    $region2: #{tpu_custom_call.1} parent=1 // loop_pre_header
      _
    $region3: #{tpu_custom_call.1} parent=1 // loop_header
      %s15 = sphi 0, %s19
      %p16 = scmp.ge.s32.totalorder %s15, 4
      %s23 = sphi 0, %s23
      %s25 = sphi 0, %s23
      %s26 = sphi 0, %s25
      %s40 = sphi 0, %s26
      %s46 = sphi 0, %s48
      %s49 = sphi 0, %s46
      %s50 = sphi 0, %s49
      %s66 = sphi 0, %s50
      %s72 = sphi 0, %s74
      %s75 = sphi 0, %s72
      %s76 = sphi 0, %s75
      %s92 = sphi 0, %s76
    $region4: #{tpu_custom_call.1} parent=1 // loop_header_branch
      %18 = sbr.rel (%p16) target = $region8
    $region5: #{tpu_custom_call.1} parent=1 // loop_body
      %s20 = ssub.s32 %s15, 1
      %s21 = ssub.s32 %s15, 2
      %s22 = sadd.s32 %s15, 1
      %s24 = sadd.s32 %s23, 1
      %p27 = scmp.eq.s32.totalorder %s15, 1
      %p28 = scmp.ne.s32.totalorder %s23, %s25
      %p29 = scmp.eq.s32.totalorder %s15, 0
      %p30 = por %p28, %p29
      %p31 = scmp.ne.s32.totalorder %s23, %s25
      %p32 = scmp.eq.s32.totalorder %s20, 1
      %p33 = por %p31, %p32
      %p34 = scmp.ne.s32.totalorder %s25, %s26
      %p35 = scmp.eq.s32.totalorder %s20, 0
      %p36 = por %p34, %p35
      %p37 = scmp.ne.s32.totalorder %s25, %s26
      %p38 = scmp.eq.s32.totalorder %s21, 1
      %p39 = por %p37, %p38
      %p41 = scmp.ne.s32.totalorder %s26, %s40
      %p42 = scmp.eq.s32.totalorder %s21, 0
      %p43 = por %p41, %p42
      %s44 = ssub.s32 %s15, %s22
      %p45 = scmp.eq.s32.totalorder %s44, 0
      %s47 = sadd.s32 %s46, 1
      %s48 = scalar_select %p45, %s46, %s47
      %p51 = pneg %p45
      %p52 = scmp.eq.s32.totalorder %s15, 1
      %p53 = por %p51, %p52
      %p54 = scmp.ne.s32.totalorder %s46, %s49
      %p55 = scmp.eq.s32.totalorder %s15, 0
      %p56 = por %p54, %p55
      %p57 = scmp.ne.s32.totalorder %s46, %s49
      %p58 = scmp.eq.s32.totalorder %s20, 1
      %p59 = por %p57, %p58
      %p60 = scmp.ne.s32.totalorder %s49, %s50
      %p61 = scmp.eq.s32.totalorder %s20, 0
      %p62 = por %p60, %p61
      %p63 = scmp.ne.s32.totalorder %s49, %s50
      %p64 = scmp.eq.s32.totalorder %s21, 1
      %p65 = por %p63, %p64
      %p67 = scmp.ne.s32.totalorder %s50, %s66
      %p68 = scmp.eq.s32.totalorder %s21, 0
      %p69 = por %p67, %p68
      %s70 = ssub.s32 %s15, %s22
      %p71 = scmp.eq.s32.totalorder %s70, 0
      %s73 = sadd.s32 %s72, 1
      %s74 = scalar_select %p71, %s72, %s73
      %p77 = pneg %p71
      %p78 = scmp.eq.s32.totalorder %s15, 1
      %p79 = por %p77, %p78
      %p80 = scmp.ne.s32.totalorder %s72, %s75
      %p81 = scmp.eq.s32.totalorder %s15, 0
      %p82 = por %p80, %p81
      %p83 = scmp.ne.s32.totalorder %s72, %s75
      %p84 = scmp.eq.s32.totalorder %s20, 1
      %p85 = por %p83, %p84
      %p86 = scmp.ne.s32.totalorder %s75, %s76
      %p87 = scmp.eq.s32.totalorder %s20, 0
      %p88 = por %p86, %p87
      %p89 = scmp.ne.s32.totalorder %s75, %s76
      %p90 = scmp.eq.s32.totalorder %s21, 1
      %p91 = por %p89, %p90
      %p93 = scmp.ne.s32.totalorder %s76, %s92
      %p94 = scmp.eq.s32.totalorder %s21, 0
      %p95 = por %p93, %p94
      %p96 = scmp.le.s32.totalorder 1, %s15
      %p97 = scmp.lt.s32.totalorder %s15, 3
      %p98 = pnand %p96, %p97
      %p99 = pneg %p98
      // Predicated region
      $region9: #{tpu_custom_call.1} parent=5 // pred_check
        _
      $region10: #{tpu_custom_call.1} parent=5 // pred_check_branch
        %101 = sbr.rel (%p98) target = $region12
      $region11: #{tpu_custom_call.1} parent=5 // pred_region
        %s102 = ssub.s32 %s15, 1
        // Predicated region
        $region13: #{tpu_custom_call.1} parent=11 // pred_check
          %p103 = pneg %p36
        $region14: #{tpu_custom_call.1} parent=11 // pred_check_branch
          %105 = sbr.rel (%p103) target = $region16
        $region15: #{tpu_custom_call.1} parent=11 // pred_region
          %s107 = ssub.s32 16, 16
          %108 = vsyncadd [#allocation5], %s107
          %111 = dma.hbm_to_smem %s0, 16, [#allocation2], [#allocation5]
        $region16: #{tpu_custom_call.1} parent=11 // pred_fallthru
          _
      $region12: #{tpu_custom_call.1} parent=5 // pred_fallthru
        _
      %p112 = scmp.lt.s32.totalorder %s15, 2
      // Predicated region
      $region17: #{tpu_custom_call.1} parent=5 // pred_check
        %p113 = pneg %p112
      $region18: #{tpu_custom_call.1} parent=5 // pred_check_branch
        %115 = sbr.rel (%p113) target = $region20
      $region19: #{tpu_custom_call.1} parent=5 // pred_region
        // Predicated region
        $region21: #{tpu_custom_call.1} parent=19 // pred_check
          %p116 = pneg %p56
        $region22: #{tpu_custom_call.1} parent=19 // pred_check_branch
          %118 = sbr.rel (%p116) target = $region24
        $region23: #{tpu_custom_call.1} parent=19 // pred_region
          %s119 = sand.u32 %s46, 1
          %s120 = scalar_lea.sflag [#allocation3], %s119
          %s121 = sand.u32 %s46, 1
          %s122 = smul.addr %s121, 8
          %s123 = scalar_lea.vmem [#allocation6], %s122
          %s125 = ssub.s32 128, 128
          %126 = vsyncadd %s120, %s125
          %s127 = smul.addr %s15, 128
          %s128 = scalar_lea.hbm %s1, %s127
          %s130 = sshll.u32 %s123, 4
          %s131 = int_to_ptr.vmem [resolvable:$true] %s130
          %133 = dma.hbm_to_vmem [thread:$0]  %s128, 128, %s131, %s120
        $region24: #{tpu_custom_call.1} parent=19 // pred_fallthru
          _
      $region20: #{tpu_custom_call.1} parent=5 // pred_fallthru
        _
      %p134 = scmp.le.s32.totalorder 1, %s15
      %p135 = scmp.lt.s32.totalorder %s15, 3
      %p136 = pnand %p134, %p135
      %p137 = pneg %p136
      // Predicated region
      $region25: #{tpu_custom_call.1} parent=5 // pred_check
        _
      $region26: #{tpu_custom_call.1} parent=5 // pred_check_branch
        %139 = sbr.rel (%p136) target = $region28
      $region27: #{tpu_custom_call.1} parent=5 // pred_region
        %s140 = ssub.s32 %s15, 1
        // Predicated region
        $region29: #{tpu_custom_call.1} parent=27 // pred_check
          %p141 = pneg %p36
        $region30: #{tpu_custom_call.1} parent=27 // pred_check_branch
          %143 = sbr.rel (%p141) target = $region32
        $region31: #{tpu_custom_call.1} parent=27 // pred_region
          %144 = dma.done [#allocation5], 16
        $region32: #{tpu_custom_call.1} parent=27 // pred_fallthru
          _
        %s145 = sand.u32 %s49, 1
        %s146 = scalar_lea.sflag [#allocation3], %s145
        %s147 = sand.u32 %s49, 1
        %s148 = smul.addr %s147, 8
        %s149 = scalar_lea.vmem [#allocation6], %s148
        // Predicated region
        $region33: #{tpu_custom_call.1} parent=27 // pred_check
          %p150 = pneg %p62
        $region34: #{tpu_custom_call.1} parent=27 // pred_check_branch
          %152 = sbr.rel (%p150) target = $region36
        $region35: #{tpu_custom_call.1} parent=27 // pred_region
          %153 = dma.done %s146, 128
        $region36: #{tpu_custom_call.1} parent=27 // pred_fallthru
          _
        %154 = sfence
        %p155 = pneg %p36
        %p156 = pneg %p33
        %s157 = sand.u32 %s49, 1
        %s158 = scalar_lea.sflag [#allocation3], %s157
        %s159 = sand.u32 %s49, 1
        %s160 = smul.addr %s159, 8
        %s161 = scalar_lea.vmem [#allocation6], %s160
        %p162 = pneg %p62
        %p163 = pneg %p59
        %p164 = pneg %p88
        %p165 = pneg %p85
        %s166 = sand.u32 %s75, 1
        %s167 = scalar_lea.sflag [#allocation4], %s166
        %s168 = sand.u32 %s75, 1
        %s169 = smul.addr %s168, 8
        %s170 = scalar_lea.vmem [#allocation7], %s169
        %s171 = sld [smem:[#allocation2]]
        %s172 = sld [smem:[#allocation2 + $0x1]]
        %v173 = vld [vmem:[%s149] sm:$0xff]
        %v174 = vstv %s171
        %v175 = vmul.f32 %v173, %v174
        %v176 = vstv %s172
        %v177 = vadd.f32 %v175, %v176
        %v178 = vtanh.pop %v177
        %v179 = vmul.f32 %v178, 0.5
        %v180 = vsub.f32 0.5, %v179
        %181 = vst [vmem:[%s170] sm:$0xff] %v180
        %s182 = sand.u32 %s75, 1
        %s183 = scalar_lea.sflag [#allocation4], %s182
        %s184 = sand.u32 %s75, 1
        %s185 = smul.addr %s184, 8
        %s186 = scalar_lea.vmem [#allocation7], %s185
        // Predicated region
        $region37: #{tpu_custom_call.1} parent=27 // pred_check
          %p187 = pneg %p85
        $region38: #{tpu_custom_call.1} parent=27 // pred_check_branch
          %189 = sbr.rel (%p187) target = $region40
        $region39: #{tpu_custom_call.1} parent=27 // pred_region
          %s191 = ssub.s32 128, 128
          %192 = vsyncadd %s183, %s191
          %s193 = smul.addr %s20, 128
          %s194 = scalar_lea.hbm %s2, %s193
          %s196 = sshll.u32 %s186, 4
          %s197 = int_to_ptr.vmem [resolvable:$true] %s196
          %199 = dma.vmem_to_hbm [thread:$0]  %s197, 128, %s194, %s183
        $region40: #{tpu_custom_call.1} parent=27 // pred_fallthru
          _
      $region28: #{tpu_custom_call.1} parent=5 // pred_fallthru
        _
      %p200 = scmp.le.s32.totalorder 2, %s15
      // Predicated region
      $region41: #{tpu_custom_call.1} parent=5 // pred_check
        %p201 = pneg %p200
      $region42: #{tpu_custom_call.1} parent=5 // pred_check_branch
        %203 = sbr.rel (%p201) target = $region44
      $region43: #{tpu_custom_call.1} parent=5 // pred_region
        %s204 = ssub.s32 %s15, 2
        // Predicated region
        $region45: #{tpu_custom_call.1} parent=43 // pred_check
          %p205 = pneg %p91
        $region46: #{tpu_custom_call.1} parent=43 // pred_check_branch
          %207 = sbr.rel (%p205) target = $region48
        $region47: #{tpu_custom_call.1} parent=43 // pred_region
          %s208 = sand.u32 %s76, 1
          %s209 = scalar_lea.sflag [#allocation4], %s208
          %s210 = sand.u32 %s76, 1
          %s211 = smul.addr %s210, 8
          %s212 = scalar_lea.vmem [#allocation7], %s211
          %213 = dma.done %s209, 128
        $region48: #{tpu_custom_call.1} parent=43 // pred_fallthru
          _
      $region44: #{tpu_custom_call.1} parent=5 // pred_fallthru
        _
    $region6: #{tpu_custom_call.1} parent=1 // loop_footer
      %s19 = sadd.s32 1, %s15
    $region7: #{tpu_custom_call.1} parent=1 // loop_footer_branch
      %14 = sbr.rel target = $region3
    $region8: #{tpu_custom_call.1} parent=1 // loop_exit
      _
    %214 = vsyncpa [#allocation3], 1
    %s215 = scalar_lea.sflag [#allocation3], 1
    %216 = vsyncpa %s215, 1
    %217 = vsyncpa [#allocation4], 1
    %s218 = scalar_lea.sflag [#allocation4], 1
    %219 = vsyncpa %s218, 1
    %220 = vsyncpa [#allocation5], 1
    %s221 = scalar_lea.sflag [#allocation5], 1
    %222 = vsyncpa %s221, 1

</llo_original>
